<compile_context>
chip_gen: v5e
topology: v5e:2x2
jax: 0.10.0
libtpu: 0.0.40
codegen_flags: <defaults>
</compile_context>

<pallas_src>
import functools

import jax
import jax.numpy as jnp
from jax.experimental import pallas as pl
from jax.experimental.pallas import tpu as pltpu


def _fwa_kernel(x_ref, w_ref, b_ref, o_ref, *, B, C, F):
    # x_ref: (B*C, F)   flattened input rows (flatten done wrapper-side)
    # w_ref: (F, 2F)    [w_val | w_wgt]   ("x @ W" layout)
    # b_ref: (1, 2F)    [b_val | b_wgt]
    # o_ref: (B, F)
    # One fused MXU matmul for both projections, f32 accumulation.
    proj = jnp.dot(x_ref[...], w_ref[...], preferred_element_type=jnp.float32)
    proj = proj + b_ref[...]                                  # broadcast (1, 2F)

    values = jnp.maximum(proj[:, :F], 0.0)                    # ReLU   (VPU)
    logits = jnp.tanh(proj[:, F:])                            # Tanh   (EUP)

    values = values.reshape(B, C, F)
    logits = logits.reshape(B, C, F)

    # numerically-stable softmax over the sensor-channel axis (PyTorch dim=1)
    logits = logits - jnp.max(logits, axis=1, keepdims=True)  # sublane reduction
    e = jnp.exp(logits)                                       # EUP
    denom = jnp.sum(e, axis=1, keepdims=True)
    weights = e / denom                                        # exact reciprocal

    out = jnp.sum(values * weights, axis=1)                    # (B, F)
    o_ref[...] = out.astype(o_ref.dtype)


def filter_weighted_aggregation_pallas(x, w_val, b_val, w_wgt, b_wgt):
    B, C, F = x.shape
    # Wrapper-side prep: flatten rows (free view on a contiguous HBM array)
    # and fuse the two projections' parameters into single tensors so the
    # kernel sees 3 inputs instead of 5.
    x2d = x.reshape(B * C, F)
    w_cat = jnp.concatenate([w_val, w_wgt], axis=1)   # (F, 2F)
    b_cat = jnp.concatenate([b_val, b_wgt], axis=1)   # (1, 2F)

    kernel = functools.partial(_fwa_kernel, B=B, C=C, F=F)
    vmem = pltpu.MemorySpace.VMEM
    return pl.pallas_call(
        kernel,
        out_shape=jax.ShapeDtypeStruct((B, F), x.dtype),
        in_specs=[
            pl.BlockSpec(memory_space=vmem),   # x2d   (B*C, F)
            pl.BlockSpec(memory_space=vmem),   # w_cat (F, 2F)
            pl.BlockSpec(memory_space=vmem),   # b_cat (1, 2F)
        ],
        out_specs=pl.BlockSpec(memory_space=vmem),
    )(x2d, w_cat, b_cat)


def filter_weighted_aggregation_reference(x, w_val, b_val, w_wgt, b_wgt):
    """Pure-JAX reference mirroring the PyTorch forward pass."""
    weights = jax.nn.softmax(jnp.tanh(x @ w_wgt + b_wgt[0]), axis=1)
    values = jax.nn.relu(x @ w_val + b_val[0])
    return jnp.sum(values * weights, axis=1)


if __name__ == "__main__":
    # Small shapes consistent with the module: batch=2, sensor_channel=8, n_channels=32.
    B, C, F = 2, 8, 32

    key = jax.random.PRNGKey(0)
    kx, kv, kbv, kw, kbw = jax.random.split(key, 5)
    x = jax.random.normal(kx, (B, C, F), dtype=jnp.float32)
    # deterministic synthetic weights ("x @ W" layout = transposed nn.Linear weights)
    w_val = jax.random.normal(kv, (F, F), dtype=jnp.float32) * 0.1
    b_val = jax.random.normal(kbv, (1, F), dtype=jnp.float32) * 0.1
    w_wgt = jax.random.normal(kw, (F, F), dtype=jnp.float32) * 0.1
    b_wgt = jax.random.normal(kbw, (1, F), dtype=jnp.float32) * 0.1

    y = filter_weighted_aggregation_pallas(x, w_val, b_val, w_wgt, b_wgt)
    y = jax.block_until_ready(y)
    assert y.shape == (B, F)

    y_ref = filter_weighted_aggregation_reference(x, w_val, b_val, w_wgt, b_wgt)
    # exact-reciprocal softmax -> tolerance tightened vs. previous revision
    assert jnp.allclose(y, y_ref, atol=1e-4, rtol=1e-4), "mismatch vs reference"

    print("KERNEL_OK")
</pallas_src>

<mosaic_0001>
module attributes {stable_mosaic.version = 11 : i64} {
  func.func @_fwa_kernel(%arg0: memref<16x32xf32, #tpu.memory_space<vmem>>, %arg1: memref<32x64xf32, #tpu.memory_space<vmem>>, %arg2: memref<1x64xf32, #tpu.memory_space<vmem>>, %arg3: memref<2x32xf32, #tpu.memory_space<vmem>>) attributes {dimension_semantics = [], scalar_prefetch = 0 : i64, scratch_operands = 0 : i64, tpu.core_type = #tpu.core_type<tc>} {
    %c0 = arith.constant 0 : index
    %c0_0 = arith.constant 0 : index
    %0 = vector.load %arg0[%c0, %c0_0] : memref<16x32xf32, #tpu.memory_space<vmem>>, vector<16x32xf32>
    %c0_1 = arith.constant 0 : index
    %c0_2 = arith.constant 0 : index
    %1 = vector.load %arg1[%c0_1, %c0_2] : memref<32x64xf32, #tpu.memory_space<vmem>>, vector<32x64xf32>
    %cst = arith.constant dense<0.000000e+00> : vector<16x64xf32>
    %2 = tpu.matmul %0, %1, %cst {dimension_numbers = #tpu.dot_dimension_numbers<[1], [0], [0], [1], [0, 0, 1, 1], [], []>} : vector<16x32xf32>, vector<32x64xf32>, vector<16x64xf32> -> vector<16x64xf32>
    %c0_3 = arith.constant 0 : index
    %c0_4 = arith.constant 0 : index
    %3 = vector.load %arg2[%c0_3, %c0_4] : memref<1x64xf32, #tpu.memory_space<vmem>>, vector<1x64xf32>
    %4 = vector.broadcast %3 : vector<1x64xf32> to vector<16x64xf32>
    %5 = arith.addf %2, %4 : vector<16x64xf32>
    %6 = vector.extract_strided_slice %5 {offsets = [0, 0], sizes = [16, 32], strides = [1, 1]} : vector<16x64xf32> to vector<16x32xf32>
    %cst_5 = arith.constant 0.000000e+00 : f32
    %7 = vector.broadcast %cst_5 : f32 to vector<16x32xf32>
    %8 = arith.maximumf %6, %7 : vector<16x32xf32>
    %9 = vector.extract_strided_slice %5 {offsets = [0, 32], sizes = [16, 32], strides = [1, 1]} : vector<16x64xf32> to vector<16x32xf32>
    %10 = math.tanh %9 : vector<16x32xf32>
    %11 = vector.shape_cast %8 : vector<16x32xf32> to vector<2x8x32xf32>
    %12 = vector.shape_cast %10 : vector<16x32xf32> to vector<2x8x32xf32>
    %cst_6 = arith.constant dense<0xFF800000> : vector<2x32xf32>
    %13 = vector.multi_reduction <maximumf>, %12, %cst_6 [1] : vector<2x8x32xf32> to vector<2x32xf32>
    %14 = vector.shape_cast %13 : vector<2x32xf32> to vector<2x1x32xf32>
    %15 = vector.broadcast %14 : vector<2x1x32xf32> to vector<2x8x32xf32>
    %16 = arith.subf %12, %15 : vector<2x8x32xf32>
    %17 = math.exp %16 : vector<2x8x32xf32>
    %cst_7 = arith.constant dense<0.000000e+00> : vector<2x32xf32>
    %18 = vector.multi_reduction <add>, %17, %cst_7 [1] : vector<2x8x32xf32> to vector<2x32xf32>
    %19 = vector.shape_cast %18 : vector<2x32xf32> to vector<2x1x32xf32>
    %20 = vector.broadcast %19 : vector<2x1x32xf32> to vector<2x8x32xf32>
    %21 = arith.divf %17, %20 : vector<2x8x32xf32>
    %22 = arith.mulf %11, %21 : vector<2x8x32xf32>
    %cst_8 = arith.constant dense<0.000000e+00> : vector<2x32xf32>
    %23 = vector.multi_reduction <add>, %22, %cst_8 [1] : vector<2x8x32xf32> to vector<2x32xf32>
    %c0_9 = arith.constant 0 : index
    %c0_10 = arith.constant 0 : index
    %24 = vector.load %arg3[%c0_9, %c0_10] : memref<2x32xf32, #tpu.memory_space<vmem>>, vector<2x32xf32>
    tpu.vector_store %arg3[%c0_9, %c0_10], %23 {strides = array<i32>} : memref<2x32xf32, #tpu.memory_space<vmem>>, vector<2x32xf32>,
    return
  }
}

</mosaic_0001>

<llo_original>
// kernel: tpu_custom_call.1
$region0: #{tpu_custom_call.1}
  #allocation0 [shape = 'u32[]', space=smem, size = 0x4, offset = 0x4, fixed_abs, tag = 'smem constant byte address 0x4 - core index']
  #allocation1 [shape = 'u32[72,128]{1,0:T(1,128)}', space=vmem, size = 0x9000, scoped, tag = 'internal scratch']
  %s0 = inlined_call_operand.hbm [shape: f32[16,32], index: 0, kind: input, shape index: {}]
  %s1 = inlined_call_operand.hbm [shape: f32[32,64], index: 1, kind: input, shape index: {}]
  %s2 = inlined_call_operand.vmem [shape: f32[1,64], index: 2, kind: input, shape index: {}]
  %s3 = inlined_call_operand.hbm [shape: f32[2,32], index: 3, kind: output, shape index: {}]
  %s4 = sld [smem:[#allocation0]]
  $region30: #{tpu_custom_call.1} parent=0
    _
  %s6 = ssub.s32 1, %s4
  %s7 = scalar_select 0, %s6, %s4
  $region1: #{tpu_custom_call.1} parent=0
    #allocation2 [shape = 'u8[8192]{0}', space=vmem, size = 0x2000, scoped, tag = 'input window, operand 0, single buffered']
    #allocation3 [shape = 's32[1]{0}', space=sflag, size = 0x4, scoped, tag = 'scoped memory for tpu_custom_call.1']
    #allocation4 [shape = 's32[1]{0}', space=sflag, size = 0x4, scoped, tag = 'scoped memory for tpu_custom_call.1']
    #allocation5 [shape = 'u8[16384]{0}', space=vmem, size = 0x4000, scoped, tag = 'input window, operand 1, single buffered']
    #allocation6 [shape = 's32[1]{0}', space=sflag, size = 0x4, scoped, tag = 'scoped memory for tpu_custom_call.1']
    #allocation7 [shape = 'u8[1024]{0}', space=vmem, size = 0x400, scoped, tag = 'output window, operand 0, single buffered']
    %8 = vsyncpa [#allocation3], 0
    %9 = vsyncpa [#allocation6], 0
    %10 = vsyncpa [#allocation4], 0
    // Predicated region
    $region2: #{tpu_custom_call.1} parent=1 // pred_check
      _
    $region3: #{tpu_custom_call.1} parent=1 // pred_check_branch
      %12 = sbr.rel (0) target = $region5
    $region4: #{tpu_custom_call.1} parent=1 // pred_region
      %14 = vsyncadd [#allocation3], 0
      %s15 = sshll.u32 %s0, 4
      %s16 = int_to_ptr.hbm [resolvable:$true] %s15
      %s17 = sshll.u32 [#allocation2], 4
      %s18 = int_to_ptr.vmem [resolvable:$true] %s17
      %23 = dma.hbm_to_vmem [thread:$0]  %s16, 256, %s18, [#allocation3], 128, 128, 8
    $region5: #{tpu_custom_call.1} parent=1 // pred_fallthru
      _
    // Predicated region
    $region6: #{tpu_custom_call.1} parent=1 // pred_check
      _
    $region7: #{tpu_custom_call.1} parent=1 // pred_check_branch
      %25 = sbr.rel (0) target = $region9
    $region8: #{tpu_custom_call.1} parent=1 // pred_region
      %27 = vsyncadd [#allocation6], 0
      %s28 = sshll.u32 %s1, 4
      %s29 = int_to_ptr.hbm [resolvable:$true] %s28
      %s30 = sshll.u32 [#allocation5], 4
      %s31 = int_to_ptr.vmem [resolvable:$true] %s30
      %36 = dma.hbm_to_vmem [thread:$0]  %s29, 512, %s31, [#allocation6], 128, 128, 8
    $region9: #{tpu_custom_call.1} parent=1 // pred_fallthru
      _
    // Predicated region
    $region10: #{tpu_custom_call.1} parent=1 // pred_check
      _
    $region11: #{tpu_custom_call.1} parent=1 // pred_check_branch
      %38 = sbr.rel (0) target = $region13
    $region12: #{tpu_custom_call.1} parent=1 // pred_region
      _
    $region13: #{tpu_custom_call.1} parent=1 // pred_fallthru
      _
    // Predicated region
    $region14: #{tpu_custom_call.1} parent=1 // pred_check
      _
    $region15: #{tpu_custom_call.1} parent=1 // pred_check_branch
      %40 = sbr.rel (0) target = $region17
    $region16: #{tpu_custom_call.1} parent=1 // pred_region
      %42 = dma.done [#allocation3], 256
    $region17: #{tpu_custom_call.1} parent=1 // pred_fallthru
      _
    // Predicated region
    $region18: #{tpu_custom_call.1} parent=1 // pred_check
      _
    $region19: #{tpu_custom_call.1} parent=1 // pred_check_branch
      %44 = sbr.rel (0) target = $region21
    $region20: #{tpu_custom_call.1} parent=1 // pred_region
      %46 = dma.done [#allocation6], 512
    $region21: #{tpu_custom_call.1} parent=1 // pred_fallthru
      _
    %v47 = vld [vmem:[#allocation2] sm:$0xff]
    %v48 = vld [vmem:[#allocation2 + $0x8] sm:$0xff]
    %v49 = vld [vmem:[#allocation5] sm:$0xff]
    %v50 = vld [vmem:[#allocation5 + $0x8] sm:$0xff]
    %v51 = vld [vmem:[#allocation5 + $0x10] sm:$0xff]
    %v52 = vld [vmem:[#allocation5 + $0x18] sm:$0xff]
    %v53 = vld [vmem:[%s2] sm:$0x1]
    %v55 = vperm.slane %v53, 0
    %vm57 = vcmask 261120
    %v59 = vsel %vm57, %v47, 0
    %v62 = vsel %vm57, %v48, 0
    %64 = vmatpush.msra.mxu0 0.0
    %65 = vmatpush.msra.mxu0 0.0
    %66 = vmatpush.msra.mxu0 0.0
    %67 = vmatpush.msra.mxu0 0.0
    %68 = vmatpush.msra.mxu0 0.0
    %69 = vmatpush.msra.mxu0 0.0
    %70 = vmatpush.msra.mxu0 0.0
    %71 = vmatpush.msra.mxu0 0.0
    %72 = vmatpush.msra.mxu0 0.0
    %73 = vmatpush.msra.mxu0 0.0
    %74 = vmatpush.msra.mxu0 0.0
    %75 = vmatpush.msra.mxu0 0.0
    %76 = vmatpush.msra.mxu0 %v52
    %77 = vmatpush.msra.mxu0 %v51
    %78 = vmatpush.msra.mxu0 %v50
    %79 = vmatpush.msra.mxu0 %v49
    %80 = vmatmul.f32.gmra.mxu0 %v59
    %v81 = vpop.f32.mrf.mxu0
    %v82 = vadd.f32 %v55, %v81
    %83 = vmatmul.f32.gmra.mxu0 %v62
    %v84 = vpop.f32.mrf.mxu0
    %v85 = vadd.f32 %v55, %v84
    %86 = vdwg.mxu0
    %v87 = vmax.f32 %v82, 0.0
    %v88 = vmax.f32 %v85, 0.0
    %v89 = vtanh.pop %v82
    %v90 = vtanh.pop %v85
    %vm91 = vcmask 523520
    %v92 = vsel %vm91, %v89, -inf
    %v93 = vrot.slane %v92, 4
    %v94 = vmax.f32 %v92, %v93
    %v95 = vrot.slane %v94, 2
    %v96 = vmax.f32 %v94, %v95
    %v97 = vrot.slane %v96, 1
    %v98 = vmax.f32 %v96, %v97
    %v99 = vsel %vm91, %v90, -inf
    %v100 = vrot.slane %v99, 4
    %v101 = vmax.f32 %v99, %v100
    %v102 = vrot.slane %v101, 2
    %v103 = vmax.f32 %v101, %v102
    %v104 = vrot.slane %v103, 1
    %v105 = vmax.f32 %v103, %v104
    %v106 = vsub.f32 %v89, %v98
    %v107 = vsub.f32 %v90, %v105
    %v108 = vmul.f32 %v106, 1.442695
    %v109 = vpow.pop %v108
    %v110 = vmul.f32 %v107, 1.442695
    %v111 = vpow.pop %v110
    %v112 = vsel %vm91, %v109, 0.0
    %v113 = vrot.slane %v112, 4
    %v114 = vadd.f32 %v112, %v113
    %v115 = vrot.slane %v114, 2
    %v116 = vadd.f32 %v114, %v115
    %v117 = vrot.slane %v116, 1
    %v118 = vadd.f32 %v116, %v117
    %v119 = vsel %vm91, %v111, 0.0
    %v120 = vrot.slane %v119, 4
    %v121 = vadd.f32 %v119, %v120
    %v122 = vrot.slane %v121, 2
    %v123 = vadd.f32 %v121, %v122
    %v124 = vrot.slane %v123, 1
    %v125 = vadd.f32 %v123, %v124
    %v126 = vrcp.pop %v118
    %v127 = vmul.f32 %v118, %v126
    %v128 = vsub.f32 1.0, %v127
    %v129 = vmul.f32 %v126, %v128
    %v130 = vadd.f32 %v126, %v129
    %vm131 = vweird.f32 %v118
    %vm132 = vweird.f32 %v126
    %vm133 = vmor %vm131, %vm132
    %v134 = vsel %vm133, %v126, %v130
    %v135 = vand.u32 2147483647, %v118
    %vm136 = vcmp.eq.f32.partialorder %v135, 8.507059e+37
    %v137 = vand.u32 %v118, 2147483648
    %v138 = vor.u32 1.1754944e-38, %v137
    %v139 = vsel %vm136, %v138, %v134
    %v140 = vmul.f32 %v109, %v139
    %v141 = vrcp.pop %v125
    %v142 = vmul.f32 %v125, %v141
    %v143 = vsub.f32 1.0, %v142
    %v144 = vmul.f32 %v141, %v143
    %v145 = vadd.f32 %v141, %v144
    %vm146 = vweird.f32 %v125
    %vm147 = vweird.f32 %v141
    %vm148 = vmor %vm146, %vm147
    %v149 = vsel %vm148, %v141, %v145
    %v150 = vand.u32 2147483647, %v125
    %vm151 = vcmp.eq.f32.partialorder %v150, 8.507059e+37
    %v152 = vand.u32 %v125, 2147483648
    %v153 = vor.u32 1.1754944e-38, %v152
    %v154 = vsel %vm151, %v153, %v149
    %v155 = vmul.f32 %v111, %v154
    %158 = vrot.lane.b32.xlu0 %v140, 96
    %v159 = vpop.permute.xlu0 %158
    %160 = vrot.lane.b32.xlu0 %v155, 96
    %v161 = vpop.permute.xlu0 %160
    %v164 = vmul.f32 %v87, %v159
    %v165 = vmul.f32 %v88, %v161
    %v166 = vsel %vm57, %v164, 0.0
    %v167 = vrot.slane %v166, 4
    %v168 = vadd.f32 %v166, %v167
    %v169 = vrot.slane %v168, 2
    %v170 = vadd.f32 %v168, %v169
    %v171 = vrot.slane %v170, 1
    %v172 = vadd.f32 %v170, %v171
    %v173 = vsel %vm57, %v165, 0.0
    %v174 = vrot.slane %v173, 4
    %v175 = vadd.f32 %v173, %v174
    %v176 = vrot.slane %v175, 2
    %v177 = vadd.f32 %v175, %v176
    %v178 = vrot.slane %v177, 1
    %v179 = vadd.f32 %v177, %v178
    %vm182 = vcmask 1041409
    %v183 = vsel %vm182, %v179, %v172
    %vm185 = vcmask 254976
    %186 = vst.msk [vmem:[#allocation7] sm:$0x3] %vm185, %v183
    // Predicated region
    $region22: #{tpu_custom_call.1} parent=1 // pred_check
      _
    $region23: #{tpu_custom_call.1} parent=1 // pred_check_branch
      %188 = sbr.rel (0) target = $region25
    $region24: #{tpu_custom_call.1} parent=1 // pred_region
      %190 = vsyncadd [#allocation4], 0
      %s192 = sshll.u32 [#allocation7], 4
      %s193 = int_to_ptr.vmem [resolvable:$true] %s192
      %s194 = sshll.u32 %s3, 4
      %s195 = int_to_ptr.hbm [resolvable:$true] %s194
      %197 = dma.vmem_to_hbm [thread:$0]  %s193, 32, %s195, [#allocation4]
    $region25: #{tpu_custom_call.1} parent=1 // pred_fallthru
      _
    // Predicated region
    $region26: #{tpu_custom_call.1} parent=1 // pred_check
      _
    $region27: #{tpu_custom_call.1} parent=1 // pred_check_branch
      %199 = sbr.rel (0) target = $region29
    $region28: #{tpu_custom_call.1} parent=1 // pred_region
      %201 = dma.done [#allocation4], 32
    $region29: #{tpu_custom_call.1} parent=1 // pred_fallthru
      _
    %202 = vsyncpa [#allocation3], 1
    %203 = vsyncpa [#allocation6], 1
    %204 = vsyncpa [#allocation4], 1

</llo_original>
